<compile_context>
chip_gen: v7x
topology: tpu7x:2x2x1
jax: 0.10.0
libtpu: 0.0.40
codegen_flags: <defaults>
</compile_context>

<pallas_src>
import functools

import jax
import jax.numpy as jnp
from jax import lax
from jax.experimental import pallas as pl
from jax.experimental.pallas import tpu as pltpu


def _cdiv(a, b):
    return -(-a // b)


def _plan(B, C_in, C_out, T, K, P, itemsize, *, target_t=8192,
          budget_bytes=16 * 1024 * 1024):
    """Pick (bb, tile_t, vmem_limit_bytes) from a VMEM budget.

    bb: batch rows per grid step. tile_t: time columns per grid step (multiple of 128, or
    the full T when a single tile suffices).
    """
    # Fold batch to amortize per-step overhead, but keep >= 2 batch blocks when B >= 2 so the
    # "parallel" batch axis can feed both v7x TensorCores (the time axis is sequential).
    bb = 1 if B <= 1 else _cdiv(B, 2)

    # Rough per-time-column VMEM cost: double-buffered input/output blocks, the in-kernel
    # stacked operand (x dtype) and the f32 accumulator.
    per_col = itemsize * (2 * bb * C_in + 2 * bb * C_out + bb * K * C_in) + 4 * bb * C_out
    cap_t = max(128, budget_bytes // max(per_col, 1))
    tile_t = min(target_t, cap_t, 128 * _cdiv(T, 128))
    tile_t = max(128, (tile_t // 128) * 128)
    if tile_t >= T:
        tile_t = T  # single time tile; a full-extent last dim is always a legal block shape

    footprint = per_col * tile_t + itemsize * bb * C_in * max(P, 1)
    vmem_limit = int(min(32 * 1024 * 1024, max(8 * 1024 * 1024, 4 * footprint)))
    return bb, tile_t, vmem_limit


def _dcc_kernel(x_ref, w_ref, b_ref, o_ref, halo_ref, *, K, dilation, P, tile_t, bb):
    # x_ref:    (bb, C_in, tile_t)     current time tile (lane axis = time)
    # w_ref:    (C_out, K*C_in)        fused taps; column k*C_in+i multiplies x[:, t - k*d]
    # b_ref:    (C_out, 1)             bias (f32)
    # o_ref:    (bb, C_out, tile_t)
    # halo_ref: (bb, C_in, max(P,1))   persistent carry: last P samples seen so far (per batch)
    j = pl.program_id(1)

    if P > 0:
        # First time tile of this batch block: nothing exists before t = 0.
        @pl.when(j == 0)
        def _():
            halo_ref[...] = jnp.zeros_like(halo_ref)

    w = w_ref[...]
    bias = b_ref[...]

    for b in range(bb):  # bb is small and static -> unrolled
        curr = x_ref[b]                                           # (C_in, tile_t)
        if P > 0:
            xw = jnp.concatenate([halo_ref[b], curr], axis=-1)    # (C_in, P + tile_t)
        else:
            xw = curr

        # Tap k is x shifted back in time by k*dilation: columns [P-k*d, P-k*d+tile_t) of xw.
        parts = [xw[:, P - k * dilation: P - k * dilation + tile_t] for k in range(K)]
        stack = parts[0] if K == 1 else jnp.concatenate(parts, axis=0)  # (K*C_in, tile_t)

        # Single fused MXU matmul over the K*C_in contraction, f32 accumulation, bias epilogue.
        acc = jnp.dot(w, stack, preferred_element_type=jnp.float32)
        o_ref[b] = (acc + bias).astype(o_ref.dtype)

        if P > 0:
            # Carry the last P columns (of everything seen so far) to the next time tile.
            halo_ref[b] = xw[:, tile_t:]


def dilated_causal_conv(x_ncw, weight_oik, bias_o, *, kernel_size, dilation, causal=True,
                        time_tile_target=8192):
    """x_ncw: (B, C_in, T); weight_oik: (C_out, C_in, K); bias_o: (C_out,) -> (B, C_out, T)."""
    if not causal:
        # TODO(synk): non-causal branch (output length T - (K-1)*dilation) not implemented in
        # the Pallas path; the module's main path (causal=True) is what is exercised here.
        raise NotImplementedError("Pallas kernel implements causal=True only")

    B, C_in, T = x_ncw.shape
    C_out, C_in_w, K = weight_oik.shape
    assert K == kernel_size and C_in_w == C_in
    d = int(dilation)
    assert d >= 1 and K >= 1
    P = (K - 1) * d

    bb, tile_t, vmem_limit = _plan(B, C_in, C_out, T, K, P, x_ncw.dtype.itemsize,
                                   target_t=time_tile_target)
    num_b = _cdiv(B, bb)
    num_t = _cdiv(T, tile_t)

    # Fused weight: y[:, t] = sum_k W[:, :, K-1-k] @ x[:, t - k*d]  ->  (C_out, K*C_in), k-major.
    w_fused = jnp.transpose(weight_oik[:, :, ::-1], (0, 2, 1)).reshape(C_out, K * C_in)
    w_fused = w_fused.astype(x_ncw.dtype)
    b_col = bias_o.reshape(C_out, 1).astype(jnp.float32)

    kernel = functools.partial(_dcc_kernel, K=K, dilation=d, P=P, tile_t=tile_t, bb=bb)

    return pl.pallas_call(
        kernel,
        out_shape=jax.ShapeDtypeStruct((B, C_out, T), x_ncw.dtype),
        grid=(num_b, num_t),
        in_specs=[
            pl.BlockSpec((bb, C_in, tile_t), lambda bi, j: (bi, 0, j)),
            pl.BlockSpec((C_out, K * C_in), lambda bi, j: (0, 0)),
            pl.BlockSpec((C_out, 1), lambda bi, j: (0, 0)),
        ],
        out_specs=pl.BlockSpec((bb, C_out, tile_t), lambda bi, j: (bi, 0, j)),
        scratch_shapes=[pltpu.VMEM((bb, C_in, max(P, 1)), x_ncw.dtype)],
        compiler_params=pltpu.CompilerParams(
            # batch blocks are independent ("parallel"); time carries the halo ("arbitrary").
            dimension_semantics=("parallel", "arbitrary"),
            vmem_limit_bytes=vmem_limit,
        ),
    )(x_ncw, w_fused, b_col)


def _reference(x_ncw, weight_oik, bias_o, *, dilation, causal=True):
    """Pure-JAX reference matching nn.Conv1d(padding=P) + causal slice."""
    K = weight_oik.shape[-1]
    P = (K - 1) * dilation if causal else 0
    y = lax.conv_general_dilated(
        x_ncw, weight_oik, window_strides=(1,), padding=[(P, P)],
        rhs_dilation=(dilation,), dimension_numbers=("NCH", "OIH", "NCH"),
    ) + bias_o[None, :, None]
    if causal and P > 0:
        y = y[:, :, :-P]
    return y


def _run_case(key, B, C_in, C_out, T, kernel_size, dilation, time_tile_target=8192):
    kx, kw, kb = jax.random.split(key, 3)
    x = jax.random.normal(kx, (B, C_in, T), dtype=jnp.float32)
    w = jax.random.normal(kw, (C_out, C_in, kernel_size), dtype=jnp.float32) * 0.1
    b = jax.random.normal(kb, (C_out,), dtype=jnp.float32) * 0.1

    out = dilated_causal_conv(
        x, w, b, kernel_size=kernel_size, dilation=dilation, causal=True,
        time_tile_target=time_tile_target)
    out = jax.block_until_ready(out)

    ref = _reference(x, w, b, dilation=dilation, causal=True)
    assert out.shape == (B, C_out, T), out.shape
    err = float(jnp.max(jnp.abs(out - ref)))
    assert jnp.allclose(out, ref, atol=1e-4, rtol=1e-4), err


if __name__ == "__main__":
    key = jax.random.PRNGKey(0)
    k1, k2, k3 = jax.random.split(key, 3)
    # Small shape consistent with the module's forward (single time tile).
    _run_case(k1, B=2, C_in=4, C_out=8, T=16, kernel_size=3, dilation=2)
    # Longer sequence, still single tile at the default target.
    _run_case(k2, B=2, C_in=4, C_out=8, T=600, kernel_size=3, dilation=3)
    # Multi-tile path: halo carry across time tiles, partial last time tile and partial
    # batch block (B=3 with bb=2); small tile target forces several time tiles.
    _run_case(k3, B=3, C_in=4, C_out=8, T=1000, kernel_size=3, dilation=3,
              time_tile_target=256)
    print("KERNEL_OK")
</pallas_src>

<mosaic_0001>
module attributes {stable_mosaic.version = 11 : i64} {
  func.func @_dcc_kernel(%arg0: i32, %arg1: i32, %arg2: memref<1x4x16xf32, #tpu.memory_space<vmem>>, %arg3: memref<8x12xf32, #tpu.memory_space<vmem>>, %arg4: memref<8x1xf32, #tpu.memory_space<vmem>>, %arg5: memref<1x8x16xf32, #tpu.memory_space<vmem>>, %arg6: memref<1x4x4xf32, #tpu.memory_space<vmem>>) attributes {dimension_semantics = [#tpu.dimension_semantics<parallel>, #tpu.dimension_semantics<arbitrary>], iteration_bounds = array<i64: 2, 1>, scalar_prefetch = 0 : i64, scratch_operands = 1 : i64, tpu.core_type = #tpu.core_type<tc>, window_params = [{transform_indices = @transform_0, window_bounds = array<i64: 1, 4, 16>}, {pipeline_mode = #tpu.pipeline_mode<synchronous>, transform_indices = @transform_1, window_bounds = array<i64: 8, 12>}, {pipeline_mode = #tpu.pipeline_mode<synchronous>, transform_indices = @transform_2, window_bounds = array<i64: 8, 1>}, {transform_indices = @transform_3, window_bounds = array<i64: 1, 8, 16>}]} {
    %c0_i32 = arith.constant 0 : i32
    %0 = arith.cmpi eq, %arg1, %c0_i32 : i32
    %1 = arith.extui %0 : i1 to i32
    %c0_i32_0 = arith.constant 0 : i32
    %2 = arith.cmpi ne, %1, %c0_i32_0 : i32
    scf.if %2 {
      %cst_16 = arith.constant 0.000000e+00 : f32
      %24 = vector.broadcast %cst_16 : f32 to vector<1x4x4xf32>
      %c0_17 = arith.constant 0 : index
      %c0_18 = arith.constant 0 : index
      %c0_19 = arith.constant 0 : index
      %25 = vector.load %arg6[%c0_17, %c0_18, %c0_19] : memref<1x4x4xf32, #tpu.memory_space<vmem>>, vector<1x4x4xf32>
      tpu.vector_store %arg6[%c0_17, %c0_18, %c0_19], %24 {strides = array<i32>} : memref<1x4x4xf32, #tpu.memory_space<vmem>>, vector<1x4x4xf32>,
    } else {
    }
    %c0 = arith.constant 0 : index
    %c0_1 = arith.constant 0 : index
    %3 = vector.load %arg3[%c0, %c0_1] : memref<8x12xf32, #tpu.memory_space<vmem>>, vector<8x12xf32>
    %c0_2 = arith.constant 0 : index
    %c0_3 = arith.constant 0 : index
    %4 = vector.load %arg4[%c0_2, %c0_3] : memref<8x1xf32, #tpu.memory_space<vmem>>, vector<8x1xf32>
    %c0_4 = arith.constant 0 : index
    %c0_5 = arith.constant 0 : index
    %c0_6 = arith.constant 0 : index
    %5 = vector.load %arg2[%c0_4, %c0_5, %c0_6] : memref<1x4x16xf32, #tpu.memory_space<vmem>>, vector<1x4x16xf32>
    %6 = vector.shape_cast %5 : vector<1x4x16xf32> to vector<4x16xf32>
    %c0_7 = arith.constant 0 : index
    %c0_8 = arith.constant 0 : index
    %c0_9 = arith.constant 0 : index
    %7 = vector.load %arg6[%c0_7, %c0_8, %c0_9] : memref<1x4x4xf32, #tpu.memory_space<vmem>>, vector<1x4x4xf32>
    %8 = vector.shape_cast %7 : vector<1x4x4xf32> to vector<4x4xf32>
    %9 = tpu.concatenate %8, %6 in 1 : vector<4x4xf32>, vector<4x16xf32> -> vector<4x20xf32>
    %10 = vector.extract_strided_slice %9 {offsets = [0, 4], sizes = [4, 16], strides = [1, 1]} : vector<4x20xf32> to vector<4x16xf32>
    %11 = vector.extract_strided_slice %9 {offsets = [0, 2], sizes = [4, 16], strides = [1, 1]} : vector<4x20xf32> to vector<4x16xf32>
    %12 = vector.extract_strided_slice %9 {offsets = [0, 0], sizes = [4, 16], strides = [1, 1]} : vector<4x20xf32> to vector<4x16xf32>
    %13 = tpu.concatenate %10, %11, %12 in 0 : vector<4x16xf32>, vector<4x16xf32>, vector<4x16xf32> -> vector<12x16xf32>
    %cst = arith.constant dense<0.000000e+00> : vector<8x16xf32>
    %14 = tpu.matmul %3, %13, %cst {dimension_numbers = #tpu.dot_dimension_numbers<[1], [0], [0], [1], [0, 0, 1, 1], [], []>} : vector<8x12xf32>, vector<12x16xf32>, vector<8x16xf32> -> vector<8x16xf32>
    %15 = vector.broadcast %4 : vector<8x1xf32> to vector<8x16xf32>
    %16 = arith.addf %14, %15 : vector<8x16xf32>
    %c0_10 = arith.constant 0 : index
    %c0_11 = arith.constant 0 : index
    %c0_12 = arith.constant 0 : index
    %17 = vector.load %arg5[%c0_10, %c0_11, %c0_12] : memref<1x8x16xf32, #tpu.memory_space<vmem>>, vector<1x8x16xf32>
    %18 = vector.shape_cast %17 : vector<1x8x16xf32> to vector<8x16xf32>
    %19 = vector.shape_cast %16 : vector<8x16xf32> to vector<1x8x16xf32>
    tpu.vector_store %arg5[%c0_10, %c0_11, %c0_12], %19 {strides = array<i32>} : memref<1x8x16xf32, #tpu.memory_space<vmem>>, vector<1x8x16xf32>,
    %20 = vector.extract_strided_slice %9 {offsets = [0, 16], sizes = [4, 4], strides = [1, 1]} : vector<4x20xf32> to vector<4x4xf32>
    %c0_13 = arith.constant 0 : index
    %c0_14 = arith.constant 0 : index
    %c0_15 = arith.constant 0 : index
    %21 = vector.load %arg6[%c0_13, %c0_14, %c0_15] : memref<1x4x4xf32, #tpu.memory_space<vmem>>, vector<1x4x4xf32>
    %22 = vector.shape_cast %21 : vector<1x4x4xf32> to vector<4x4xf32>
    %23 = vector.shape_cast %20 : vector<4x4xf32> to vector<1x4x4xf32>
    tpu.vector_store %arg6[%c0_13, %c0_14, %c0_15], %23 {strides = array<i32>} : memref<1x4x4xf32, #tpu.memory_space<vmem>>, vector<1x4x4xf32>,
    return
  }
  func.func @transform_0(%arg0: i32, %arg1: i32) -> (i32, i32, i32) {
    %c0_i32 = arith.constant 0 : i32
    %c0_i32_0 = arith.constant 0 : i32
    return %arg0, %c0_i32, %arg1 : i32, i32, i32
  }
  func.func @transform_1(%arg0: i32, %arg1: i32) -> (i32, i32) {
    %c0_i32 = arith.constant 0 : i32
    %c0_i32_0 = arith.constant 0 : i32
    %c0_i32_1 = arith.constant 0 : i32
    return %c0_i32, %c0_i32_0 : i32, i32
  }
  func.func @transform_2(%arg0: i32, %arg1: i32) -> (i32, i32) {
    %c0_i32 = arith.constant 0 : i32
    %c0_i32_0 = arith.constant 0 : i32
    %c0_i32_1 = arith.constant 0 : i32
    return %c0_i32, %c0_i32_0 : i32, i32
  }
  func.func @transform_3(%arg0: i32, %arg1: i32) -> (i32, i32, i32) {
    %c0_i32 = arith.constant 0 : i32
    %c0_i32_0 = arith.constant 0 : i32
    return %arg0, %c0_i32, %arg1 : i32, i32, i32
  }
}

</mosaic_0001>

<llo_original>
// kernel: tpu_custom_call.1
$region0: #{tpu_custom_call.1}
  #allocation0 [shape = 'u32[]', space=smem, size = 0x4, offset = 0x4, fixed_abs, tag = 'smem constant byte address 0x4 - core index']
  #allocation1 [shape = 'u32[144,128]{1,0:T(1,128)}', space=vmem, size = 0x12000, scoped, tag = 'internal scratch']
  #allocation2 [shape = 'f32[1,4,4]{2,1,0:T(4,128)}', space=vmem, size = 0x800, scoped, tag = 'scratch operand']
  %s0 = inlined_call_operand.vmem [shape: f32[2,4,16], index: 0, kind: input, shape index: {}]
  %s1 = inlined_call_operand.hbm [shape: f32[8,12], index: 1, kind: input, shape index: {}]
  %s2 = inlined_call_operand.vmem [shape: f32[8,1], index: 2, kind: input, shape index: {}]
  %s3 = inlined_call_operand.hbm [shape: f32[2,8,16], index: 3, kind: output, shape index: {}]
  %s4 = sld [smem:[#allocation0]]
  $region53: #{tpu_custom_call.1} parent=0
    _
  %s6 = ssub.s32 1, %s4
  %s7 = scalar_select 0, %s6, %s4
  $region1: #{tpu_custom_call.1} parent=0
    #allocation3 [shape = 'u8[4096]{0}', space=vmem, size = 0x1000, scoped, tag = 'input window, operand 1, single buffered']
    #allocation4 [shape = 's32[2]{0}', space=sflag, size = 0x8, scoped, tag = 'scoped memory for tpu_custom_call.1']
    #allocation5 [shape = 's32[2]{0}', space=sflag, size = 0x8, scoped, tag = 'scoped memory for tpu_custom_call.1']
    #allocation6 [shape = 'u8[8192]{0}', space=vmem, size = 0x2000, scoped, tag = 'output window, operand 0']
    %8 = vsyncpa [#allocation4], 0
    %9 = vsyncpa [#allocation5], 0
    %s10 = scalar_lea.sflag [#allocation5], 1
    %11 = vsyncpa %s10, 0
    loop: start=0, step=1, limit=4
    $region2: #{tpu_custom_call.1} parent=1 // loop_pre_header
      _
    $region3: #{tpu_custom_call.1} parent=1 // loop_header
      %s13 = sphi 0, %s17
      %p14 = scmp.ge.s32.totalorder %s13, 4
      %s20 = sphi 0, %s32
      %s21 = sphi 0, %s28
      %s22 = sphi 0, %s20
      %s23 = sphi 0, %s21
      %s24 = sphi 0, %s22
      %s25 = sphi 0, %s23
      %s37 = sphi 0, %s39
      %s40 = sphi 0, %s37
      %s41 = sphi 0, %s40
      %s57 = sphi 0, %s41
      %s61 = sphi 0, %s61
      %s63 = sphi 0, %s61
      %s64 = sphi 0, %s63
      %s78 = sphi 0, %s64
      %s82 = sphi 0, %s82
      %s84 = sphi 0, %s82
      %s85 = sphi 0, %s84
      %s99 = sphi 0, %s85
      %s107 = sphi 0, %s109
      %s110 = sphi 0, %s107
      %s111 = sphi 0, %s110
      %s127 = sphi 0, %s111
    $region4: #{tpu_custom_call.1} parent=1 // loop_header_branch
      %16 = sbr.rel (%p14) target = $region8
    $region5: #{tpu_custom_call.1} parent=1 // loop_body
      %s18 = ssub.s32 %s13, 1
      %s19 = ssub.s32 %s13, 2
      %s26 = sadd.s32 1, %s21
      %p27 = scmp.ge.s32.totalorder %s26, 1
      %s28 = scalar_select %p27, 0, %s26
      %s29 = sadd.s32 1, %s20
      %s30 = scalar_select %p27, %s29, %s20
      %p31 = scmp.ge.s32.totalorder %s30, 2
      %s32 = scalar_select %p31, 0, %s30
      %s33 = ssub.s32 %s20, %s32
      %s34 = ssub.s32 %s21, %s28
      %s35 = sor.u32 %s33, %s34
      %p36 = scmp.eq.s32.totalorder %s35, 0
      %s38 = sadd.s32 %s37, 1
      %s39 = scalar_select %p36, %s37, %s38
      %p42 = pneg %p36
      %p43 = scmp.eq.s32.totalorder %s13, 1
      %p44 = por %p42, %p43
      %p45 = scmp.ne.s32.totalorder %s37, %s40
      %p46 = scmp.eq.s32.totalorder %s13, 0
      %p47 = por %p45, %p46
      %p48 = scmp.ne.s32.totalorder %s37, %s40
      %p49 = scmp.eq.s32.totalorder %s18, 1
      %p50 = por %p48, %p49
      %p51 = scmp.ne.s32.totalorder %s40, %s41
      %p52 = scmp.eq.s32.totalorder %s18, 0
      %p53 = por %p51, %p52
      %p54 = scmp.ne.s32.totalorder %s40, %s41
      %p55 = scmp.eq.s32.totalorder %s19, 1
      %p56 = por %p54, %p55
      %p58 = scmp.ne.s32.totalorder %s41, %s57
      %p59 = scmp.eq.s32.totalorder %s19, 0
      %p60 = por %p58, %p59
      %s62 = sadd.s32 %s61, 1
      %p65 = scmp.eq.s32.totalorder %s13, 1
      %p66 = scmp.ne.s32.totalorder %s61, %s63
      %p67 = scmp.eq.s32.totalorder %s13, 0
      %p68 = por %p66, %p67
      %p69 = scmp.ne.s32.totalorder %s61, %s63
      %p70 = scmp.eq.s32.totalorder %s18, 1
      %p71 = por %p69, %p70
      %p72 = scmp.ne.s32.totalorder %s63, %s64
      %p73 = scmp.eq.s32.totalorder %s18, 0
      %p74 = por %p72, %p73
      %p75 = scmp.ne.s32.totalorder %s63, %s64
      %p76 = scmp.eq.s32.totalorder %s19, 1
      %p77 = por %p75, %p76
      %p79 = scmp.ne.s32.totalorder %s64, %s78
      %p80 = scmp.eq.s32.totalorder %s19, 0
      %p81 = por %p79, %p80
      %s83 = sadd.s32 %s82, 1
      %p86 = scmp.eq.s32.totalorder %s13, 1
      %p87 = scmp.ne.s32.totalorder %s82, %s84
      %p88 = scmp.eq.s32.totalorder %s13, 0
      %p89 = por %p87, %p88
      %p90 = scmp.ne.s32.totalorder %s82, %s84
      %p91 = scmp.eq.s32.totalorder %s18, 1
      %p92 = por %p90, %p91
      %p93 = scmp.ne.s32.totalorder %s84, %s85
      %p94 = scmp.eq.s32.totalorder %s18, 0
      %p95 = por %p93, %p94
      %p96 = scmp.ne.s32.totalorder %s84, %s85
      %p97 = scmp.eq.s32.totalorder %s19, 1
      %p98 = por %p96, %p97
      %p100 = scmp.ne.s32.totalorder %s85, %s99
      %p101 = scmp.eq.s32.totalorder %s19, 0
      %p102 = por %p100, %p101
      %s103 = ssub.s32 %s20, %s32
      %s104 = ssub.s32 %s21, %s28
      %s105 = sor.u32 %s103, %s104
      %p106 = scmp.eq.s32.totalorder %s105, 0
      %s108 = sadd.s32 %s107, 1
      %s109 = scalar_select %p106, %s107, %s108
      %p112 = pneg %p106
      %p113 = scmp.eq.s32.totalorder %s13, 1
      %p114 = por %p112, %p113
      %p115 = scmp.ne.s32.totalorder %s107, %s110
      %p116 = scmp.eq.s32.totalorder %s13, 0
      %p117 = por %p115, %p116
      %p118 = scmp.ne.s32.totalorder %s107, %s110
      %p119 = scmp.eq.s32.totalorder %s18, 1
      %p120 = por %p118, %p119
      %p121 = scmp.ne.s32.totalorder %s110, %s111
      %p122 = scmp.eq.s32.totalorder %s18, 0
      %p123 = por %p121, %p122
      %p124 = scmp.ne.s32.totalorder %s110, %s111
      %p125 = scmp.eq.s32.totalorder %s19, 1
      %p126 = por %p124, %p125
      %p128 = scmp.ne.s32.totalorder %s111, %s127
      %p129 = scmp.eq.s32.totalorder %s19, 0
      %p130 = por %p128, %p129
      %p131 = scmp.le.s32.totalorder 1, %s13
      %p132 = scmp.lt.s32.totalorder %s13, 3
      %p133 = pnand %p131, %p132
      %p134 = pneg %p133
      // Predicated region
      $region9: #{tpu_custom_call.1} parent=5 // pred_check
        _
      $region10: #{tpu_custom_call.1} parent=5 // pred_check_branch
        %136 = sbr.rel (%p133) target = $region12
      $region11: #{tpu_custom_call.1} parent=5 // pred_region
        %s137 = ssub.s32 %s13, 1
        // Predicated region
        $region13: #{tpu_custom_call.1} parent=11 // pred_check
          %p138 = pneg %p74
        $region14: #{tpu_custom_call.1} parent=11 // pred_check_branch
          %140 = sbr.rel (%p138) target = $region16
        $region15: #{tpu_custom_call.1} parent=11 // pred_region
          %s142 = ssub.s32 128, 128
          %143 = vsyncadd [#allocation4], %s142
          %s145 = sshll.u32 [#allocation3], 4
          %s146 = int_to_ptr.vmem [resolvable:$true] %s145
          %148 = dma.hbm_to_vmem [thread:$0]  %s1, 128, %s146, [#allocation4]
        $region16: #{tpu_custom_call.1} parent=11 // pred_fallthru
          _
        // Predicated region
        $region17: #{tpu_custom_call.1} parent=11 // pred_check
          %p149 = pneg %p95
        $region18: #{tpu_custom_call.1} parent=11 // pred_check_branch
          %151 = sbr.rel (%p149) target = $region20
        $region19: #{tpu_custom_call.1} parent=11 // pred_region
          _
        $region20: #{tpu_custom_call.1} parent=11 // pred_fallthru
          _
      $region12: #{tpu_custom_call.1} parent=5 // pred_fallthru
        _
      %p152 = scmp.lt.s32.totalorder %s13, 2
      // Predicated region
      $region21: #{tpu_custom_call.1} parent=5 // pred_check
        %p153 = pneg %p152
      $region22: #{tpu_custom_call.1} parent=5 // pred_check_branch
        %155 = sbr.rel (%p153) target = $region24
      $region23: #{tpu_custom_call.1} parent=5 // pred_region
        // Predicated region
        $region25: #{tpu_custom_call.1} parent=23 // pred_check
          %p156 = pneg %p47
        $region26: #{tpu_custom_call.1} parent=23 // pred_check_branch
          %158 = sbr.rel (%p156) target = $region28
        $region27: #{tpu_custom_call.1} parent=23 // pred_region
          %p159 = scmp.lt.s32.totalorder %s20, 1
          %s160 = scalar_select %p159, %s20, 1
          %p161 = scmp.lt.s32.totalorder %s21, 0
          %s162 = scalar_select %p161, %s21, 0
          %s163 = sadd.s32 %s162, %s160
          %s164 = smul.addr %s163, 4
          %s165 = scalar_lea.vmem %s0, %s164
        $region28: #{tpu_custom_call.1} parent=23 // pred_fallthru
          _
      $region24: #{tpu_custom_call.1} parent=5 // pred_fallthru
        _
      %p166 = scmp.le.s32.totalorder 1, %s13
      %p167 = scmp.lt.s32.totalorder %s13, 3
      %p168 = pnand %p166, %p167
      %p169 = pneg %p168
      // Predicated region
      $region29: #{tpu_custom_call.1} parent=5 // pred_check
        _
      $region30: #{tpu_custom_call.1} parent=5 // pred_check_branch
        %171 = sbr.rel (%p168) target = $region32
      $region31: #{tpu_custom_call.1} parent=5 // pred_region
        %s172 = ssub.s32 %s13, 1
        // Predicated region
        $region33: #{tpu_custom_call.1} parent=31 // pred_check
          %p173 = pneg %p74
        $region34: #{tpu_custom_call.1} parent=31 // pred_check_branch
          %175 = sbr.rel (%p173) target = $region36
        $region35: #{tpu_custom_call.1} parent=31 // pred_region
          %176 = dma.done [#allocation4], 128
        $region36: #{tpu_custom_call.1} parent=31 // pred_fallthru
          _
        %p177 = scmp.lt.s32.totalorder %s22, 1
        %s178 = scalar_select %p177, %s22, 1
        %p179 = scmp.lt.s32.totalorder %s23, 0
        %s180 = scalar_select %p179, %s23, 0
        %s181 = sadd.s32 %s180, %s178
        %s182 = smul.addr %s181, 4
        %s183 = scalar_lea.vmem %s0, %s182
        %p184 = pneg %p53
        %p185 = pneg %p50
        %p186 = pneg %p74
        %p187 = pneg %p71
        %p188 = pneg %p95
        %p189 = pneg %p92
        %p190 = pneg %p123
        %p191 = pneg %p120
        %s192 = sand.u32 %s110, 1
        %s193 = scalar_lea.sflag [#allocation5], %s192
        %s194 = sand.u32 %s110, 1
        %s195 = smul.addr %s194, 8
        %s196 = scalar_lea.vmem [#allocation6], %s195
        %p197 = scmp.lt.s32.totalorder %s22, 1
        %s198 = scalar_select %p197, %s22, 1
        %p199 = scmp.lt.s32.totalorder %s23, 0
        %s200 = scalar_select %p199, %s23, 0
        %s201 = sadd.s32 %s200, %s198
        %s202 = smul.addr %s201, 4
        %s203 = scalar_lea.vmem %s0, %s202
        %p204 = scmp.eq.s32.totalorder %s23, 0
        // Predicated region
        $region37: #{tpu_custom_call.1} parent=31 // pred_check
          %p205 = pneg %p204
        $region38: #{tpu_custom_call.1} parent=31 // pred_check_branch
          %207 = sbr.rel (%p205) target = $region40
        $region39: #{tpu_custom_call.1} parent=31 // pred_region
          %vm208 = vcmask 27648
          %209 = vst.msk [vmem:[#allocation2] sm:$0xf] %vm208, 0.0
        $region40: #{tpu_custom_call.1} parent=31 // pred_fallthru
          _
        %v210 = vld [vmem:[#allocation3] sm:$0xff]
        %v211 = vld [vmem:[%s2] sm:$0xff]
        %v212 = vld [vmem:[%s203] sm:$0xf]
        %v213 = vld [vmem:[#allocation2] sm:$0xf]
        %215 = vrot.lane.b32.xlu0 %v212, 4
        %v216 = vpop.permute.xlu0 %215
        %vm218 = vcmask 31744
        %v219 = vsel %vm218, %v213, %v216
        %v221 = vrot.slane %v219, 4
        %222 = vrot.lane.b32.xlu0 %v221, 2
        %v223 = vpop.permute.xlu0 %222
        %225 = vrot.lane.b32.xlu0 %v219, 4
        %v226 = vpop.permute.xlu0 %225
        %vm227 = vcmask 1043456
        %v228 = vsel %vm227, %v219, %v223
        %230 = vset.pattern.permute.xlu0 0
        %231 = vperm.xlu0 %230, %v211
        %v232 = vpop.permute.xlu0 %231
        %235 = vrot.lane.b32.xlu0 %v228, 124
        %v236 = vpop.permute.xlu0 %235
        %237 = vrot.lane.b32.xlu0 %v226, 124
        %v238 = vpop.permute.xlu0 %237
        %vm240 = vcmask 97280
        %v242 = vsel %vm240, %v210, 0
        %v244 = vsel %vm227, %v238, 0
        %246 = vmatprep.subr.mxu0 0.0
        %247 = vmatpush1.msra.mxu0 %v236
        %248 = vmatprep.subr.mxu0 0.0
        %249 = vmatpush1.msra.mxu0 %v244
        %250 = vmatprep.subr.mxu0 0.0
        %251 = vmatpush1.msra.mxu0 0.0
        %252 = vmatprep.subr.mxu0 0.0
        %253 = vmatpush1.msra.mxu0 0.0
        %254 = vmatprep.subr.mxu0 0.0
        %255 = vmatpush1.msra.mxu0 0.0
        %256 = vmatprep.subr.mxu0 0.0
        %257 = vmatpush1.msra.mxu0 0.0
        %258 = vmatprep.subr.mxu0 0.0
        %259 = vmatpush1.msra.mxu0 0.0
        %260 = vmatprep.subr.mxu0 0.0
        %261 = vmatpush1.msra.mxu0 0.0
        %262 = vmatprep.subr.mxu0 0.0
        %263 = vmatpush1.msra.mxu0 0.0
        %264 = vmatprep.subr.mxu0 0.0
        %265 = vmatpush1.msra.mxu0 0.0
        %266 = vmatprep.subr.mxu0 0.0
        %267 = vmatpush1.msra.mxu0 0.0
        %268 = vmatprep.subr.mxu0 0.0
        %269 = vmatpush1.msra.mxu0 0.0
        %270 = vmatprep.subr.mxu0 0.0
        %271 = vmatpush1.msra.mxu0 0.0
        %272 = vmatprep.subr.mxu0 0.0
        %273 = vmatpush1.msra.mxu0 0.0
        %274 = vmatprep.subr.mxu0 0.0
        %275 = vmatpush1.msra.mxu0 0.0
        %276 = vmatprep.subr.mxu0 0.0
        %277 = vmatpush1.msra.mxu0 0.0
        %278 = vmatprep.subr.mxu0 0.0
        %279 = vmatpush1.msra.mxu0 0.0
        %280 = vmatprep.subr.mxu0 0.0
        %281 = vmatpush1.msra.mxu0 0.0
        %282 = vmatprep.subr.mxu0 0.0
        %283 = vmatpush1.msra.mxu0 0.0
        %284 = vmatprep.subr.mxu0 0.0
        %285 = vmatpush1.msra.mxu0 0.0
        %286 = vmatprep.subr.mxu0 0.0
        %287 = vmatpush1.msra.mxu0 0.0
        %288 = vmatprep.subr.mxu0 0.0
        %289 = vmatpush1.msra.mxu0 0.0
        %290 = vmatprep.subr.mxu0 0.0
        %291 = vmatpush1.msra.mxu0 0.0
        %292 = vmatprep.subr.mxu0 0.0
        %293 = vmatpush1.msra.mxu0 0.0
        %294 = vmatprep.subr.mxu0 0.0
        %295 = vmatpush1.msra.mxu0 0.0
        %296 = vmatprep.subr.mxu0 0.0
        %297 = vmatpush1.msra.mxu0 0.0
        %298 = vmatprep.subr.mxu0 0.0
        %299 = vmatpush1.msra.mxu0 0.0
        %300 = vmatprep.subr.mxu0 0.0
        %301 = vmatpush1.msra.mxu0 0.0
        %302 = vmatprep.subr.mxu0 0.0
        %303 = vmatpush1.msra.mxu0 0.0
        %304 = vmatprep.subr.mxu0 0.0
        %305 = vmatpush1.msra.mxu0 0.0
        %306 = vmatprep.subr.mxu0 0.0
        %307 = vmatpush1.msra.mxu0 0.0
        %308 = vmatprep.subr.mxu0 0.0
        %309 = vmatpush1.msra.mxu0 0.0
        %310 = vmatprep.mubr.f32.mxu0 0.0
        %311 = vmatmul.mubr.f32.gmra.mrb[0].mxu0 %v242
        %v312 = vpop.f32.mrb[0].mxu0
        %v313 = vadd.f32 %v232, %v312
        %v314 = vpop.f32.mrb[0].mxu0
        %315 = vdwg.mxu0
        %vm316 = vcmask 130048
        %317 = vst.msk [vmem:[%s196] sm:$0xff] %vm316, %v313
        %318 = vrot.lane.b32.xlu0 %v219, 112
        %v319 = vpop.permute.xlu0 %318
        %vm321 = vcmask 27648
        %322 = vst.msk [vmem:[#allocation2] sm:$0xf] %vm321, %v319
        %s323 = sand.u32 %s110, 1
        %s324 = scalar_lea.sflag [#allocation5], %s323
        %s325 = sand.u32 %s110, 1
        %s326 = smul.addr %s325, 8
        %s327 = scalar_lea.vmem [#allocation6], %s326
        // Predicated region
        $region41: #{tpu_custom_call.1} parent=31 // pred_check
          %p328 = pneg %p120
        $region42: #{tpu_custom_call.1} parent=31 // pred_check_branch
          %330 = sbr.rel (%p328) target = $region44
        $region43: #{tpu_custom_call.1} parent=31 // pred_region
          %s332 = ssub.s32 128, 128
          %333 = vsyncadd %s324, %s332
          %s334 = sadd.s32 %s23, %s22
          %s335 = smul.addr %s334, 128
          %s336 = scalar_lea.hbm %s3, %s335
          %s338 = sshll.u32 %s327, 4
          %s339 = int_to_ptr.vmem [resolvable:$true] %s338
          %341 = dma.vmem_to_hbm [thread:$0]  %s339, 128, %s336, %s324
        $region44: #{tpu_custom_call.1} parent=31 // pred_fallthru
          _
      $region32: #{tpu_custom_call.1} parent=5 // pred_fallthru
        _
      %p342 = scmp.le.s32.totalorder 2, %s13
      // Predicated region
      $region45: #{tpu_custom_call.1} parent=5 // pred_check
        %p343 = pneg %p342
      $region46: #{tpu_custom_call.1} parent=5 // pred_check_branch
        %345 = sbr.rel (%p343) target = $region48
      $region47: #{tpu_custom_call.1} parent=5 // pred_region
        %s346 = ssub.s32 %s13, 2
        // Predicated region
        $region49: #{tpu_custom_call.1} parent=47 // pred_check
          %p347 = pneg %p126
        $region50: #{tpu_custom_call.1} parent=47 // pred_check_branch
          %349 = sbr.rel (%p347) target = $region52
        $region51: #{tpu_custom_call.1} parent=47 // pred_region
          %s350 = sand.u32 %s111, 1
          %s351 = scalar_lea.sflag [#allocation5], %s350
          %s352 = sand.u32 %s111, 1
          %s353 = smul.addr %s352, 8
          %s354 = scalar_lea.vmem [#allocation6], %s353
          %355 = dma.done %s351, 128
        $region52: #{tpu_custom_call.1} parent=47 // pred_fallthru
          _
      $region48: #{tpu_custom_call.1} parent=5 // pred_fallthru
        _
    $region6: #{tpu_custom_call.1} parent=1 // loop_footer
      %s17 = sadd.s32 1, %s13
    $region7: #{tpu_custom_call.1} parent=1 // loop_footer_branch
      %12 = sbr.rel target = $region3
    $region8: #{tpu_custom_call.1} parent=1 // loop_exit
      _
    %356 = vsyncpa [#allocation4], 1
    %s357 = scalar_lea.sflag [#allocation4], 1
    %358 = vsyncpa %s357, 1
    %359 = vsyncpa [#allocation5], 1
    %s360 = scalar_lea.sflag [#allocation5], 1
    %361 = vsyncpa %s360, 1

</llo_original>
